<compile_context>
chip_gen: v6e
topology: v6e:2x2x1
jax: 0.10.0
libtpu: 0.0.40
codegen_flags: <defaults>
</compile_context>

<pallas_src>
import jax
import jax.numpy as jnp
from jax.experimental import pallas as pl
from jax.experimental.pallas import tpu as pltpu

HIDDEN_STATE = 20


def _mlp_kernel(xT_ref, w1T_ref, b1_ref, w2T_ref, b2_ref, oT_ref):
    # fc1 + ReLU, feature-major: (H, S) @ (S, TB) -> (H, TB) on the MXU.
    h = jnp.dot(w1T_ref[...], xT_ref[...], preferred_element_type=jnp.float32)
    h = jnp.maximum(h + b1_ref[...], 0.0)            # (H, TB) + (H, 1), ReLU on VPU
    # fc2: (A, H) @ (H, TB) -> (A, TB).
    y = jnp.dot(w2T_ref[...], h, preferred_element_type=jnp.float32)
    oT_ref[...] = (y + b2_ref[...]).astype(oT_ref.dtype)


def _round_up(x, m):
    return ((x + m - 1) // m) * m


def mlp_forward(x, w1, b1, w2, b2, *, tb=512):
    """x: (B, S); w1: (S, H); b1: (H,); w2: (H, A); b2: (A,) -> (B, A)."""
    B, S = x.shape
    H = w1.shape[1]
    A = w2.shape[1]

    # Lane-aligned batch tile: multiple of 128, capped at `tb`.
    TB = min(_round_up(tb, 128), _round_up(B, 128))
    B_pad = _round_up(B, TB)

    # Feature-major layout (lane axis = batch).  Wrapper-side transposes are
    # cheap layout plumbing; the kernel then does lane-dense loads/stores.
    xT = x.T                                   # (S, B)
    if B_pad != B:
        xT = jnp.pad(xT, ((0, 0), (0, B_pad - B)))
    w1T = w1.T                                 # (H, S)
    w2T = w2.T                                 # (A, H)
    b1c = b1.reshape(H, 1)
    b2c = b2.reshape(A, 1)

    grid = (B_pad // TB,)

    oT = pl.pallas_call(
        _mlp_kernel,
        out_shape=jax.ShapeDtypeStruct((A, B_pad), x.dtype),
        grid_spec=pltpu.PrefetchScalarGridSpec(
            num_scalar_prefetch=0,
            grid=grid,
            in_specs=[
                pl.BlockSpec((S, TB), lambda i: (0, i)),   # x tile: lane axis = batch
                pl.BlockSpec((H, S), lambda i: (0, 0)),    # weights/biases stay VMEM-resident
                pl.BlockSpec((H, 1), lambda i: (0, 0)),
                pl.BlockSpec((A, H), lambda i: (0, 0)),
                pl.BlockSpec((A, 1), lambda i: (0, 0)),
            ],
            out_specs=pl.BlockSpec((A, TB), lambda i: (0, i)),
        ),
        compiler_params=pltpu.CompilerParams(
            # Batch tiles are independent -> shard the grid across both TCs on v7x.
            dimension_semantics=("parallel",),
        ),
    )(xT, w1T, b1c, w2T, b2c)

    return oT[:, :B].T                          # back to the PyTorch (B, A) contract


def init_mlp_params(key, state_dim, action_dim, hidden=HIDDEN_STATE):
    """Mimics PyTorch nn.Linear default init; weights stored as (in, out)."""
    k1, k2, k3, k4 = jax.random.split(key, 4)
    bound1 = 1.0 / jnp.sqrt(state_dim)
    bound2 = 1.0 / jnp.sqrt(hidden)
    w1 = jax.random.uniform(k1, (state_dim, hidden), jnp.float32, -bound1, bound1)
    b1 = jax.random.uniform(k2, (hidden,), jnp.float32, -bound1, bound1)
    w2 = jax.random.uniform(k3, (hidden, action_dim), jnp.float32, -bound2, bound2)
    b2 = jax.random.uniform(k4, (action_dim,), jnp.float32, -bound2, bound2)
    return w1, b1, w2, b2


def _ref(x, w1, b1, w2, b2):
    return jnp.maximum(x @ w1 + b1, 0.0) @ w2 + b2


if __name__ == "__main__":
    key = jax.random.PRNGKey(0)
    k_params, k_x1, k_x2 = jax.random.split(key, 3)

    state_dim = 4      # e.g. CartPole observation
    action_dim = 2     # e.g. CartPole actions
    w1, b1, w2, b2 = init_mlp_params(k_params, state_dim, action_dim)

    # Small batch (single padded tile).
    x_small = jax.random.normal(k_x1, (8, state_dim), jnp.float32)
    out_small = jax.block_until_ready(mlp_forward(x_small, w1, b1, w2, b2))
    assert out_small.shape == (8, action_dim)
    assert jnp.allclose(out_small, _ref(x_small, w1, b1, w2, b2), atol=1e-5, rtol=1e-5)

    # Larger ragged batch exercising a multi-step (pipelined) batch grid.
    x_big = jax.random.normal(k_x2, (300, state_dim), jnp.float32)
    out_big = jax.block_until_ready(mlp_forward(x_big, w1, b1, w2, b2, tb=128))
    assert out_big.shape == (300, action_dim)
    assert jnp.allclose(out_big, _ref(x_big, w1, b1, w2, b2), atol=1e-5, rtol=1e-5)

    print("KERNEL_OK")
</pallas_src>

<mosaic_0001>
module attributes {stable_mosaic.version = 11 : i64} {
  func.func @_mlp_kernel(%arg0: i32, %arg1: memref<4x128xf32, #tpu.memory_space<vmem>>, %arg2: memref<20x4xf32, #tpu.memory_space<vmem>>, %arg3: memref<20x1xf32, #tpu.memory_space<vmem>>, %arg4: memref<2x20xf32, #tpu.memory_space<vmem>>, %arg5: memref<2x1xf32, #tpu.memory_space<vmem>>, %arg6: memref<2x128xf32, #tpu.memory_space<vmem>>) attributes {dimension_semantics = [#tpu.dimension_semantics<parallel>], iteration_bounds = array<i64: 1>, scalar_prefetch = 0 : i64, scratch_operands = 0 : i64, tpu.core_type = #tpu.core_type<tc>, window_params = [{transform_indices = @transform_0, window_bounds = array<i64: 4, 128>}, {pipeline_mode = #tpu.pipeline_mode<synchronous>, transform_indices = @transform_1, window_bounds = array<i64: 20, 4>}, {pipeline_mode = #tpu.pipeline_mode<synchronous>, transform_indices = @transform_2, window_bounds = array<i64: 20, 1>}, {pipeline_mode = #tpu.pipeline_mode<synchronous>, transform_indices = @transform_3, window_bounds = array<i64: 2, 20>}, {pipeline_mode = #tpu.pipeline_mode<synchronous>, transform_indices = @transform_4, window_bounds = array<i64: 2, 1>}, {transform_indices = @transform_5, window_bounds = array<i64: 2, 128>}]} {
    %c0 = arith.constant 0 : index
    %c0_0 = arith.constant 0 : index
    %0 = vector.load %arg2[%c0, %c0_0] : memref<20x4xf32, #tpu.memory_space<vmem>>, vector<20x4xf32>
    %c0_1 = arith.constant 0 : index
    %c0_2 = arith.constant 0 : index
    %1 = vector.load %arg1[%c0_1, %c0_2] : memref<4x128xf32, #tpu.memory_space<vmem>>, vector<4x128xf32>
    %cst = arith.constant dense<0.000000e+00> : vector<20x128xf32>
    %2 = tpu.matmul %0, %1, %cst {dimension_numbers = #tpu.dot_dimension_numbers<[1], [0], [0], [1], [0, 0, 1, 1], [], []>} : vector<20x4xf32>, vector<4x128xf32>, vector<20x128xf32> -> vector<20x128xf32>
    %c0_3 = arith.constant 0 : index
    %c0_4 = arith.constant 0 : index
    %3 = vector.load %arg3[%c0_3, %c0_4] : memref<20x1xf32, #tpu.memory_space<vmem>>, vector<20x1xf32>
    %4 = vector.broadcast %3 : vector<20x1xf32> to vector<20x128xf32>
    %5 = arith.addf %2, %4 : vector<20x128xf32>
    %cst_5 = arith.constant 0.000000e+00 : f32
    %6 = vector.broadcast %cst_5 : f32 to vector<20x128xf32>
    %7 = arith.maximumf %5, %6 : vector<20x128xf32>
    %c0_6 = arith.constant 0 : index
    %c0_7 = arith.constant 0 : index
    %8 = vector.load %arg4[%c0_6, %c0_7] : memref<2x20xf32, #tpu.memory_space<vmem>>, vector<2x20xf32>
    %cst_8 = arith.constant dense<0.000000e+00> : vector<2x128xf32>
    %9 = tpu.matmul %8, %7, %cst_8 {dimension_numbers = #tpu.dot_dimension_numbers<[1], [0], [0], [1], [0, 0, 1, 1], [], []>} : vector<2x20xf32>, vector<20x128xf32>, vector<2x128xf32> -> vector<2x128xf32>
    %c0_9 = arith.constant 0 : index
    %c0_10 = arith.constant 0 : index
    %10 = vector.load %arg5[%c0_9, %c0_10] : memref<2x1xf32, #tpu.memory_space<vmem>>, vector<2x1xf32>
    %11 = vector.broadcast %10 : vector<2x1xf32> to vector<2x128xf32>
    %12 = arith.addf %9, %11 : vector<2x128xf32>
    %c0_11 = arith.constant 0 : index
    %c0_12 = arith.constant 0 : index
    %13 = vector.load %arg6[%c0_11, %c0_12] : memref<2x128xf32, #tpu.memory_space<vmem>>, vector<2x128xf32>
    tpu.vector_store %arg6[%c0_11, %c0_12], %12 {strides = array<i32>} : memref<2x128xf32, #tpu.memory_space<vmem>>, vector<2x128xf32>,
    return
  }
  func.func @transform_0(%arg0: i32) -> (i32, i32) {
    %c0_i32 = arith.constant 0 : i32
    %c0_i32_0 = arith.constant 0 : i32
    return %c0_i32, %arg0 : i32, i32
  }
  func.func @transform_1(%arg0: i32) -> (i32, i32) {
    %c0_i32 = arith.constant 0 : i32
    %c0_i32_0 = arith.constant 0 : i32
    %c0_i32_1 = arith.constant 0 : i32
    return %c0_i32, %c0_i32_0 : i32, i32
  }
  func.func @transform_2(%arg0: i32) -> (i32, i32) {
    %c0_i32 = arith.constant 0 : i32
    %c0_i32_0 = arith.constant 0 : i32
    %c0_i32_1 = arith.constant 0 : i32
    return %c0_i32, %c0_i32_0 : i32, i32
  }
  func.func @transform_3(%arg0: i32) -> (i32, i32) {
    %c0_i32 = arith.constant 0 : i32
    %c0_i32_0 = arith.constant 0 : i32
    %c0_i32_1 = arith.constant 0 : i32
    return %c0_i32, %c0_i32_0 : i32, i32
  }
  func.func @transform_4(%arg0: i32) -> (i32, i32) {
    %c0_i32 = arith.constant 0 : i32
    %c0_i32_0 = arith.constant 0 : i32
    %c0_i32_1 = arith.constant 0 : i32
    return %c0_i32, %c0_i32_0 : i32, i32
  }
  func.func @transform_5(%arg0: i32) -> (i32, i32) {
    %c0_i32 = arith.constant 0 : i32
    %c0_i32_0 = arith.constant 0 : i32
    return %c0_i32, %arg0 : i32, i32
  }
}

</mosaic_0001>

<llo_original>
// kernel: tpu_custom_call.1
$region0: #{tpu_custom_call.1}
  #allocation0 [shape = 'u32[]', space=smem, size = 0x4, offset = 0x4, fixed_abs, tag = 'smem constant byte address 0x4 - core index']
  #allocation1 [shape = 'u32[144,128]{1,0:T(1,128)}', space=vmem, size = 0x12000, scoped, tag = 'internal scratch']
  %s0 = inlined_call_operand.vmem [shape: f32[4,128], index: 0, kind: input, shape index: {}]
  %s1 = inlined_call_operand.vmem [shape: f32[20,4], index: 1, kind: input, shape index: {}]
  %s2 = inlined_call_operand.vmem [shape: f32[20,1], index: 2, kind: input, shape index: {}]
  %s3 = inlined_call_operand.vmem [shape: f32[2,20], index: 3, kind: input, shape index: {}]
  %s4 = inlined_call_operand.vmem [shape: f32[2,1], index: 4, kind: input, shape index: {}]
  %s5 = inlined_call_operand.hbm [shape: f32[2,128], index: 5, kind: output, shape index: {}]
  %s6 = sld [smem:[#allocation0]]
  $region30: #{tpu_custom_call.1} parent=0
    _
  %s8 = ssub.s32 1, %s6
  %s9 = scalar_select 0, %s8, %s6
  $region1: #{tpu_custom_call.1} parent=0
    #allocation2 [shape = 'u8[1024]{0}', space=vmem, size = 0x400, scoped, tag = 'output window, operand 0, single buffered']
    #allocation3 [shape = 's32[1]{0}', space=sflag, size = 0x4, scoped, tag = 'scoped memory for tpu_custom_call.1']
    %10 = vsyncpa [#allocation3], 0
    // Predicated region
    $region2: #{tpu_custom_call.1} parent=1 // pred_check
      _
    $region3: #{tpu_custom_call.1} parent=1 // pred_check_branch
      %12 = sbr.rel (0) target = $region5
    $region4: #{tpu_custom_call.1} parent=1 // pred_region
      _
    $region5: #{tpu_custom_call.1} parent=1 // pred_fallthru
      _
    // Predicated region
    $region6: #{tpu_custom_call.1} parent=1 // pred_check
      _
    $region7: #{tpu_custom_call.1} parent=1 // pred_check_branch
      %14 = sbr.rel (0) target = $region9
    $region8: #{tpu_custom_call.1} parent=1 // pred_region
      _
    $region9: #{tpu_custom_call.1} parent=1 // pred_fallthru
      _
    // Predicated region
    $region10: #{tpu_custom_call.1} parent=1 // pred_check
      _
    $region11: #{tpu_custom_call.1} parent=1 // pred_check_branch
      %16 = sbr.rel (0) target = $region13
    $region12: #{tpu_custom_call.1} parent=1 // pred_region
      _
    $region13: #{tpu_custom_call.1} parent=1 // pred_fallthru
      _
    // Predicated region
    $region14: #{tpu_custom_call.1} parent=1 // pred_check
      _
    $region15: #{tpu_custom_call.1} parent=1 // pred_check_branch
      %18 = sbr.rel (0) target = $region17
    $region16: #{tpu_custom_call.1} parent=1 // pred_region
      _
    $region17: #{tpu_custom_call.1} parent=1 // pred_fallthru
      _
    // Predicated region
    $region18: #{tpu_custom_call.1} parent=1 // pred_check
      _
    $region19: #{tpu_custom_call.1} parent=1 // pred_check_branch
      %20 = sbr.rel (0) target = $region21
    $region20: #{tpu_custom_call.1} parent=1 // pred_region
      _
    $region21: #{tpu_custom_call.1} parent=1 // pred_fallthru
      _
    %v21 = vld [vmem:[%s1] sm:$0xff]
    %v22 = vld [vmem:[%s1 + $0x8] sm:$0xff]
    %v23 = vld [vmem:[%s1 + $0x10] sm:$0xf]
    %v24 = vld [vmem:[%s0] sm:$0xf]
    %v25 = vld [vmem:[%s2] sm:$0xff]
    %v26 = vld [vmem:[%s2 + $0x8] sm:$0xff]
    %v27 = vld [vmem:[%s2 + $0x10] sm:$0xf]
    %29 = vset.pattern.permute.xlu0 0
    %30 = vperm.xlu0 %29, %v25
    %v31 = vpop.permute.xlu0 %30
    %34 = vset.pattern.permute.xlu0 0
    %35 = vperm.xlu0 %34, %v26
    %v36 = vpop.permute.xlu0 %35
    %39 = vset.pattern.permute.xlu0 0
    %40 = vperm.xlu0 %39, %v27
    %v41 = vpop.permute.xlu0 %40
    %vm43 = vcmask 31744
    %v45 = vsel %vm43, %v21, 0
    %v48 = vsel %vm43, %v22, 0
    %v51 = vsel %vm43, %v23, 0
    %vm53 = vcmask 1043456
    %v55 = vsel %vm53, %v24, 0
    %57 = vmatprep.subr.mxu0 0.0
    %58 = vmatpush1.msra.mxu0 0.0
    %59 = vmatprep.subr.mxu0 0.0
    %60 = vmatpush1.msra.mxu0 0.0
    %61 = vmatprep.subr.mxu0 0.0
    %62 = vmatpush1.msra.mxu0 0.0
    %63 = vmatprep.subr.mxu0 0.0
    %64 = vmatpush1.msra.mxu0 0.0
    %65 = vmatprep.subr.mxu0 0.0
    %66 = vmatpush1.msra.mxu0 0.0
    %67 = vmatprep.subr.mxu0 0.0
    %68 = vmatpush1.msra.mxu0 0.0
    %69 = vmatprep.subr.mxu0 0.0
    %70 = vmatpush1.msra.mxu0 0.0
    %71 = vmatprep.subr.mxu0 0.0
    %72 = vmatpush1.msra.mxu0 0.0
    %73 = vmatprep.subr.mxu0 0.0
    %74 = vmatpush1.msra.mxu0 0.0
    %75 = vmatprep.subr.mxu0 0.0
    %76 = vmatpush1.msra.mxu0 0.0
    %77 = vmatprep.subr.mxu0 0.0
    %78 = vmatpush1.msra.mxu0 0.0
    %79 = vmatprep.subr.mxu0 0.0
    %80 = vmatpush1.msra.mxu0 0.0
    %81 = vmatprep.subr.mxu0 0.0
    %82 = vmatpush1.msra.mxu0 0.0
    %83 = vmatprep.subr.mxu0 0.0
    %84 = vmatpush1.msra.mxu0 0.0
    %85 = vmatprep.subr.mxu0 0.0
    %86 = vmatpush1.msra.mxu0 0.0
    %87 = vmatprep.subr.mxu0 0.0
    %88 = vmatpush1.msra.mxu0 %v55
    %89 = vmatprep.subr.mxu0 0.0
    %90 = vmatpush2.msra.mxu0 0.0
    %91 = vmatprep.subr.mxu0 0.0
    %92 = vmatpush2.msra.mxu0 0.0
    %93 = vmatprep.subr.mxu0 0.0
    %94 = vmatpush2.msra.mxu0 0.0
    %95 = vmatprep.subr.mxu0 0.0
    %96 = vmatpush2.msra.mxu0 0.0
    %97 = vmatprep.subr.mxu0 0.0
    %98 = vmatpush2.msra.mxu0 0.0
    %99 = vmatprep.subr.mxu0 0.0
    %100 = vmatpush2.msra.mxu0 0.0
    %101 = vmatprep.subr.mxu0 0.0
    %102 = vmatpush2.msra.mxu0 0.0
    %103 = vmatprep.subr.mxu0 0.0
    %104 = vmatpush2.msra.mxu0 0.0
    %105 = vmatprep.subr.mxu0 0.0
    %106 = vmatpush2.msra.mxu0 0.0
    %107 = vmatprep.subr.mxu0 0.0
    %108 = vmatpush2.msra.mxu0 0.0
    %109 = vmatprep.subr.mxu0 0.0
    %110 = vmatpush2.msra.mxu0 0.0
    %111 = vmatprep.subr.mxu0 0.0
    %112 = vmatpush2.msra.mxu0 0.0
    %113 = vmatprep.subr.mxu0 0.0
    %114 = vmatpush2.msra.mxu0 0.0
    %115 = vmatprep.subr.mxu0 0.0
    %116 = vmatpush2.msra.mxu0 0.0
    %117 = vmatprep.subr.mxu0 0.0
    %118 = vmatpush2.msra.mxu0 0.0
    %119 = vmatprep.subr.mxu0 0.0
    %120 = vmatpush2.msra.mxu0 0.0
    %121 = vmatprep.mubr.f32.mxu0 0.0
    %122 = vmatmul.mubr.f32.gmra.mxu0 %v45
    %v123 = vpop.f32.mrf.mxu0
    %v124 = vadd.f32 %v31, %v123
    %v125 = vpop.f32.mrf.mxu0
    %126 = vmatprep.mubr.f32.mxu0 0.0
    %127 = vmatmul.mubr.f32.gmra.mxu0 %v48
    %v128 = vpop.f32.mrf.mxu0
    %v129 = vadd.f32 %v36, %v128
    %v130 = vpop.f32.mrf.mxu0
    %131 = vmatprep.mubr.f32.mxu0 0.0
    %132 = vmatmul.mubr.f32.gmra.mxu0 %v51
    %v133 = vpop.f32.mrf.mxu0
    %v134 = vadd.f32 %v41, %v133
    %v135 = vpop.f32.mrf.mxu0
    %136 = vdwg.mxu0
    %v137 = vmax.f32 %v124, 0.0
    %v138 = vmax.f32 %v129, 0.0
    %v139 = vmax.f32 %v134, 0.0
    %v140 = vld [vmem:[%s3] sm:$0x3]
    %v141 = vld [vmem:[%s4] sm:$0x3]
    %143 = vset.pattern.permute.xlu0 0
    %144 = vperm.xlu0 %143, %v141
    %v145 = vpop.permute.xlu0 %144
    %vm147 = vcmask 162816
    %v149 = vsel %vm147, %v140, 0
    %v152 = vsel %vm53, %v139, 0
    %154 = vmatprep.subr.mxu0 0.0
    %155 = vmatpush1.msra.mxu0 0.0
    %156 = vmatprep.subr.mxu0 0.0
    %157 = vmatpush1.msra.mxu0 0.0
    %158 = vmatprep.subr.mxu0 0.0
    %159 = vmatpush1.msra.mxu0 0.0
    %160 = vmatprep.subr.mxu0 0.0
    %161 = vmatpush1.msra.mxu0 0.0
    %162 = vmatprep.subr.mxu0 0.0
    %163 = vmatpush1.msra.mxu0 0.0
    %164 = vmatprep.subr.mxu0 0.0
    %165 = vmatpush1.msra.mxu0 0.0
    %166 = vmatprep.subr.mxu0 0.0
    %167 = vmatpush1.msra.mxu0 0.0
    %168 = vmatprep.subr.mxu0 0.0
    %169 = vmatpush1.msra.mxu0 0.0
    %170 = vmatprep.subr.mxu0 0.0
    %171 = vmatpush1.msra.mxu0 0.0
    %172 = vmatprep.subr.mxu0 0.0
    %173 = vmatpush1.msra.mxu0 0.0
    %174 = vmatprep.subr.mxu0 0.0
    %175 = vmatpush1.msra.mxu0 0.0
    %176 = vmatprep.subr.mxu0 0.0
    %177 = vmatpush1.msra.mxu0 0.0
    %178 = vmatprep.subr.mxu0 0.0
    %179 = vmatpush1.msra.mxu0 0.0
    %180 = vmatprep.subr.mxu0 0.0
    %181 = vmatpush1.msra.mxu0 %v152
    %182 = vmatprep.subr.mxu0 0.0
    %183 = vmatpush1.msra.mxu0 %v138
    %184 = vmatprep.subr.mxu0 0.0
    %185 = vmatpush1.msra.mxu0 %v137
    %186 = vmatprep.subr.mxu0 0.0
    %187 = vmatpush2.msra.mxu0 0.0
    %188 = vmatprep.subr.mxu0 0.0
    %189 = vmatpush2.msra.mxu0 0.0
    %190 = vmatprep.subr.mxu0 0.0
    %191 = vmatpush2.msra.mxu0 0.0
    %192 = vmatprep.subr.mxu0 0.0
    %193 = vmatpush2.msra.mxu0 0.0
    %194 = vmatprep.subr.mxu0 0.0
    %195 = vmatpush2.msra.mxu0 0.0
    %196 = vmatprep.subr.mxu0 0.0
    %197 = vmatpush2.msra.mxu0 0.0
    %198 = vmatprep.subr.mxu0 0.0
    %199 = vmatpush2.msra.mxu0 0.0
    %200 = vmatprep.subr.mxu0 0.0
    %201 = vmatpush2.msra.mxu0 0.0
    %202 = vmatprep.subr.mxu0 0.0
    %203 = vmatpush2.msra.mxu0 0.0
    %204 = vmatprep.subr.mxu0 0.0
    %205 = vmatpush2.msra.mxu0 0.0
    %206 = vmatprep.subr.mxu0 0.0
    %207 = vmatpush2.msra.mxu0 0.0
    %208 = vmatprep.subr.mxu0 0.0
    %209 = vmatpush2.msra.mxu0 0.0
    %210 = vmatprep.subr.mxu0 0.0
    %211 = vmatpush2.msra.mxu0 0.0
    %212 = vmatprep.subr.mxu0 0.0
    %213 = vmatpush2.msra.mxu0 0.0
    %214 = vmatprep.subr.mxu0 0.0
    %215 = vmatpush2.msra.mxu0 0.0
    %216 = vmatprep.subr.mxu0 0.0
    %217 = vmatpush2.msra.mxu0 0.0
    %218 = vmatprep.mubr.f32.mxu0 0.0
    %219 = vmatmul.mubr.f32.gmra.mxu0 %v149
    %v220 = vpop.f32.mrf.mxu0
    %v221 = vadd.f32 %v145, %v220
    %v222 = vpop.f32.mrf.mxu0
    %223 = vdwg.mxu0
    %224 = vst [vmem:[#allocation2] sm:$0x3] %v221
    // Predicated region
    $region22: #{tpu_custom_call.1} parent=1 // pred_check
      _
    $region23: #{tpu_custom_call.1} parent=1 // pred_check_branch
      %226 = sbr.rel (0) target = $region25
    $region24: #{tpu_custom_call.1} parent=1 // pred_region
      %s228 = ssub.s32 32, 32
      %229 = vsyncadd [#allocation3], %s228
      %s231 = sshll.u32 [#allocation2], 4
      %s232 = int_to_ptr.vmem [resolvable:$true] %s231
      %234 = dma.vmem_to_hbm [thread:$0]  %s232, 32, %s5, [#allocation3]
    $region25: #{tpu_custom_call.1} parent=1 // pred_fallthru
      _
    // Predicated region
    $region26: #{tpu_custom_call.1} parent=1 // pred_check
      _
    $region27: #{tpu_custom_call.1} parent=1 // pred_check_branch
      %236 = sbr.rel (0) target = $region29
    $region28: #{tpu_custom_call.1} parent=1 // pred_region
      %237 = dma.done [#allocation3], 32
    $region29: #{tpu_custom_call.1} parent=1 // pred_fallthru
      _
    %238 = vsyncpa [#allocation3], 1

</llo_original>
